<compile_context>
chip_gen: v7x
topology: tpu7x:2x2x1
jax: 0.10.0
libtpu: 0.0.40
codegen_flags: <defaults>
</compile_context>

<pallas_src>
import jax
import jax.numpy as jnp
import numpy as np
from jax.experimental import pallas as pl
from jax.experimental.pallas import tpu as pltpu


_VMEM_LIMIT_BYTES = 40 * 1024 * 1024   # explicit scoped-VMEM limit; safe on v5e/v6e/v7x

# Per-grid-step payload targets (bytes).  ~0.35 us fixed overhead per grid step
# means each step should move >= ~1-4 MiB to sit near the HBM roofline.
_P1_TARGET_BYTES = 4 * 1024 * 1024
_P1_MAX_BLOCK_BYTES = 8 * 1024 * 1024    # pass 1: 2 double-buffered q blocks live
_P2_TARGET_BYTES = 6 * 1024 * 1024
_P2_MAX_BLOCK_BYTES = 7 * 1024 * 1024    # pass 2: 4 live blocks (k in + out, x2 buffers)


def _pick_hw_tile(HW, C, target_bytes, elem_bytes):
    """Largest lane-dense (multiple-of-128) tile that divides HW while keeping a
    single-batch (C, tile) slab under target_bytes.  Full extent when HW is not
    a multiple of 128 (always legal) or the whole row already fits the target."""
    if HW % 128 != 0 or C * HW * elem_bytes <= target_bytes:
        return HW
    m = HW // 128
    max_d = max(1, target_bytes // (C * 128 * elem_bytes))
    best = 1
    for d in range(1, m + 1):
        if m % d == 0 and d <= max_d:
            best = d
    return 128 * best


def _pick_b_tile(B, per_batch_block_bytes, target_bytes, max_block_bytes):
    """Smallest divisor of B whose block meets the payload target, capped by the
    per-block VMEM residency budget.  Guarantees >=1."""
    tb = 1
    for d in range(1, B + 1):
        if B % d != 0:
            continue
        if d * per_batch_block_bytes > max_block_bytes:
            break
        tb = d
        if d * per_batch_block_bytes >= target_bytes:
            break
    return tb


def _make_pool_mlp_kernel(hw_total):
    """Pass 1: streaming max/avg pooling over H*W with the MLP + sigmoid fused
    into the finalize branch.  Emits the per-channel gate directly."""
    inv_hw = 1.0 / float(hw_total)

    def kernel(q_ref, w1t_ref, b1_ref, w2t_ref, b2_ref, gate_ref, max_acc, sum_acc):
        j = pl.program_id(1)

        q = q_ref[...]                                    # (TB, C, THW) f32
        # Per-step lane-axis partial reduce into tiny (TB, C, 1) accumulators.
        tile_max = jnp.max(q, axis=-1, keepdims=True)     # (TB, C, 1)
        tile_sum = jnp.sum(q, axis=-1, keepdims=True)     # (TB, C, 1)

        @pl.when(j == 0)
        def _init():
            max_acc[...] = tile_max
            sum_acc[...] = tile_sum

        @pl.when(j > 0)
        def _accumulate():
            max_acc[...] = jnp.maximum(max_acc[...], tile_max)
            sum_acc[...] = sum_acc[...] + tile_sum

        @pl.when(j == pl.num_programs(1) - 1)
        def _finalize():
            # (TB, C, 1) pooled stats; channel axis on sublanes, as produced.
            x_max = max_acc[...]
            x_avg = sum_acc[...] * inv_hw

            w1t = w1t_ref[...]          # (C, R)  (pre-transposed in the wrapper)
            b1v = b1_ref[...]           # (1, R)
            w2t = w2t_ref[...]          # (R, C)
            b2v = b2_ref[...]           # (1, C)

            def mlp(x3):                # x3: (TB, C, 1), exact f32 VPU math
                # (TB, C, 1) * (1, C, R) -> (TB, C, R); contract C on sublanes.
                h = jnp.sum(x3 * w1t[None, :, :], axis=1) + b1v          # (TB, R)
                h = jnp.maximum(h, 0.0)                                  # ReLU
                # Dropout(0.2) is identity in eval mode.
                y = jnp.sum(h[:, :, None] * w2t[None, :, :], axis=1) + b2v
                return y                                                 # (TB, C)

            logits = mlp(x_max) + mlp(x_avg)                             # (TB, C)
            gate = 1.0 / (1.0 + jnp.exp(-logits))                        # sigmoid
            # Lane-dense (TB, 1, C) store.
            gate_ref[...] = gate[:, None, :].astype(gate_ref.dtype)

    return kernel


def _apply_kernel(gate_ref, k_ref, o_ref):
    # gate_ref: (TB, C, 1); k_ref / o_ref: (TB, C, THW) — wide lane-dense I/O.
    o_ref[...] = (k_ref[...] * gate_ref[...]).astype(o_ref.dtype)


@jax.jit
def cam_forward(q, k, w1, b1, w2, b2):
    """q, k: (B, C, H, W).  PyTorch Linear layouts: w1 (R, C), b1 (R,),
    w2 (C, R), b2 (C,).  Returns k * sigmoid(mlp(max_pool(q)) + mlp(avg_pool(q)))."""
    B, C, H, W = k.shape
    HW = H * W

    q3 = q.reshape(B, C, HW).astype(jnp.float32)
    k3 = k.reshape(B, C, HW)
    k_elem = jnp.dtype(k3.dtype).itemsize

    # MLP params, pre-transposed / reshaped for in-kernel use (all tiny).
    w1t = w1.T.astype(jnp.float32)                 # (C, R)
    w2t = w2.T.astype(jnp.float32)                 # (R, C)
    b1r = b1.reshape(1, -1).astype(jnp.float32)    # (1, R)
    b2r = b2.reshape(1, -1).astype(jnp.float32)    # (1, C)
    R = w1t.shape[1]

    # ---- pass 1: pooling + fused MLP/sigmoid -> per-channel gate ---------------
    thw1 = _pick_hw_tile(HW, C, _P1_TARGET_BYTES, 4)
    tb1 = _pick_b_tile(B, C * thw1 * 4, _P1_TARGET_BYTES, _P1_MAX_BLOCK_BYTES)
    grid1 = (B // tb1, HW // thw1)

    gate = pl.pallas_call(
        _make_pool_mlp_kernel(HW),
        out_shape=jax.ShapeDtypeStruct((B, 1, C), jnp.float32),
        grid_spec=pltpu.PrefetchScalarGridSpec(
            num_scalar_prefetch=0,
            grid=grid1,
            in_specs=[
                pl.BlockSpec((tb1, C, thw1), lambda i, j: (i, 0, j)),   # q
                pl.BlockSpec((C, R), lambda i, j: (0, 0)),              # w1t
                pl.BlockSpec((1, R), lambda i, j: (0, 0)),              # b1
                pl.BlockSpec((R, C), lambda i, j: (0, 0)),              # w2t
                pl.BlockSpec((1, C), lambda i, j: (0, 0)),              # b2
            ],
            out_specs=pl.BlockSpec((tb1, 1, C), lambda i, j: (i, 0, 0)),
            scratch_shapes=[pltpu.VMEM((tb1, C, 1), jnp.float32),
                            pltpu.VMEM((tb1, C, 1), jnp.float32)],
        ),
        compiler_params=pltpu.CompilerParams(
            dimension_semantics=("parallel", "arbitrary"),
            vmem_limit_bytes=_VMEM_LIMIT_BYTES),
        cost_estimate=pl.CostEstimate(
            flops=2 * B * C * HW + 4 * B * C * R,
            transcendentals=B * C,
            bytes_accessed=4 * (B * C * HW + B * C + 2 * C * R + R + C)),
    )(q3, w1t, b1r, w2t, b2r)

    # (B, 1, C) -> (B, C, 1): same linear layout, free reshape.
    gate3 = gate.reshape(B, C, 1).astype(k3.dtype)

    # ---- pass 2: stream k and apply the per-channel gate ------------------------
    thw2 = _pick_hw_tile(HW, C, _P2_TARGET_BYTES, k_elem)
    tb2 = _pick_b_tile(B, C * thw2 * k_elem, _P2_TARGET_BYTES, _P2_MAX_BLOCK_BYTES)
    grid2 = (B // tb2, HW // thw2)

    out = pl.pallas_call(
        _apply_kernel,
        out_shape=jax.ShapeDtypeStruct((B, C, HW), k3.dtype),
        grid_spec=pltpu.PrefetchScalarGridSpec(
            num_scalar_prefetch=0,
            grid=grid2,
            in_specs=[
                pl.BlockSpec((tb2, C, 1), lambda i, j: (i, 0, 0)),       # gate
                pl.BlockSpec((tb2, C, thw2), lambda i, j: (i, 0, j)),    # k
            ],
            out_specs=pl.BlockSpec((tb2, C, thw2), lambda i, j: (i, 0, j)),
        ),
        compiler_params=pltpu.CompilerParams(
            dimension_semantics=("parallel", "parallel"),
            vmem_limit_bytes=_VMEM_LIMIT_BYTES),
        cost_estimate=pl.CostEstimate(
            flops=B * C * HW,
            transcendentals=0,
            bytes_accessed=k_elem * B * C * (2 * HW) + k_elem * B * C),
    )(gate3, k3)

    return out.reshape(B, C, H, W)


def cam_reference(q, k, w1, b1, w2, b2):
    """Pure-JAX reference mirroring the PyTorch forward (eval mode)."""
    B, C, H, W = k.shape
    qf = q.reshape(B, C, H * W).astype(jnp.float32)
    q_max = jnp.max(qf, axis=-1)                     # (B, C)
    q_avg = jnp.mean(qf, axis=-1)                    # (B, C)
    hp = jax.lax.Precision.HIGHEST                   # full-f32 matmuls in the reference

    def mlp(x):                                      # x: (B, C)
        h = jnp.maximum(jnp.dot(x, w1.T, precision=hp) + b1, 0.0)
        return jnp.dot(h, w2.T, precision=hp) + b2   # (B, C)

    cw = mlp(q_max) + mlp(q_avg)                     # (B, C)
    gate = jax.nn.sigmoid(cw)[:, :, None, None]      # (B, C, 1, 1)
    return k * gate.astype(k.dtype)


if __name__ == "__main__":
    def run_case(B, C, H, W, reduction_ratio, seed):
        R = C // reduction_ratio
        if R < 1:
            R = C
        key = jax.random.PRNGKey(seed)
        kq, kk, kw1, kb1, kw2, kb2 = jax.random.split(key, 6)

        q = jax.random.normal(kq, (B, C, H, W), dtype=jnp.float32)
        k = jax.random.normal(kk, (B, C, H, W), dtype=jnp.float32)
        w1 = jax.random.normal(kw1, (R, C), dtype=jnp.float32) * 0.1
        b1 = jax.random.normal(kb1, (R,), dtype=jnp.float32) * 0.1
        w2 = jax.random.normal(kw2, (C, R), dtype=jnp.float32) * 0.1
        b2 = jax.random.normal(kb2, (C,), dtype=jnp.float32) * 0.1

        out = jax.block_until_ready(cam_forward(q, k, w1, b1, w2, b2))
        ref = cam_reference(q, k, w1, b1, w2, b2)
        np.testing.assert_allclose(np.asarray(out), np.asarray(ref),
                                   rtol=1e-4, atol=1e-5)

    # Small canonical shape: single grid step per pass.
    run_case(2, 16, 32, 32, 8, 0)
    # Odd spatial size (H*W not a multiple of 128 -> full-extent lane blocks).
    run_case(2, 16, 14, 14, 8, 1)
    # Larger map exercising multi-tile HW reduction + batch blocking (grid (1, 2)).
    run_case(2, 64, 160, 160, 8, 2)

    print("KERNEL_OK")
</pallas_src>

<mosaic_0001>
module attributes {stable_mosaic.version = 11 : i64} {
  func.func @kernel(%arg0: i32, %arg1: i32, %arg2: memref<2x16x1024xf32, #tpu.memory_space<vmem>>, %arg3: memref<16x2xf32, #tpu.memory_space<vmem>>, %arg4: memref<1x2xf32, #tpu.memory_space<vmem>>, %arg5: memref<2x16xf32, #tpu.memory_space<vmem>>, %arg6: memref<1x16xf32, #tpu.memory_space<vmem>>, %arg7: memref<2x1x16xf32, #tpu.memory_space<vmem>>, %arg8: memref<2x16x1xf32, #tpu.memory_space<vmem>>, %arg9: memref<2x16x1xf32, #tpu.memory_space<vmem>>) attributes {dimension_semantics = [#tpu.dimension_semantics<parallel>, #tpu.dimension_semantics<arbitrary>], iteration_bounds = array<i64: 1, 1>, scalar_prefetch = 0 : i64, scratch_operands = 2 : i64, tpu.core_type = #tpu.core_type<tc>, window_params = [{transform_indices = @transform_0, window_bounds = array<i64: 2, 16, 1024>}, {pipeline_mode = #tpu.pipeline_mode<synchronous>, transform_indices = @transform_1, window_bounds = array<i64: 16, 2>}, {pipeline_mode = #tpu.pipeline_mode<synchronous>, transform_indices = @transform_2, window_bounds = array<i64: 1, 2>}, {pipeline_mode = #tpu.pipeline_mode<synchronous>, transform_indices = @transform_3, window_bounds = array<i64: 2, 16>}, {pipeline_mode = #tpu.pipeline_mode<synchronous>, transform_indices = @transform_4, window_bounds = array<i64: 1, 16>}, {transform_indices = @transform_5, window_bounds = array<i64: 2, 1, 16>}]} {
    %c0 = arith.constant 0 : index
    %c0_0 = arith.constant 0 : index
    %c0_1 = arith.constant 0 : index
    %0 = vector.load %arg2[%c0, %c0_0, %c0_1] : memref<2x16x1024xf32, #tpu.memory_space<vmem>>, vector<2x16x1024xf32>
    %cst = arith.constant dense<0xFF800000> : vector<2x16xf32>
    %1 = vector.multi_reduction <maximumf>, %0, %cst [2] : vector<2x16x1024xf32> to vector<2x16xf32>
    %2 = vector.shape_cast %1 : vector<2x16xf32> to vector<2x16x1xf32>
    %cst_2 = arith.constant dense<0.000000e+00> : vector<2x16xf32>
    %3 = vector.multi_reduction <add>, %0, %cst_2 [2] : vector<2x16x1024xf32> to vector<2x16xf32>
    %4 = vector.shape_cast %3 : vector<2x16xf32> to vector<2x16x1xf32>
    %c0_i32 = arith.constant 0 : i32
    %5 = arith.cmpi eq, %arg1, %c0_i32 : i32
    %6 = arith.extui %5 : i1 to i32
    %c0_i32_3 = arith.constant 0 : i32
    %7 = arith.cmpi ne, %6, %c0_i32_3 : i32
    scf.if %7 {
      %c0_8 = arith.constant 0 : index
      %c0_9 = arith.constant 0 : index
      %c0_10 = arith.constant 0 : index
      %14 = vector.load %arg8[%c0_8, %c0_9, %c0_10] : memref<2x16x1xf32, #tpu.memory_space<vmem>>, vector<2x16x1xf32>
      tpu.vector_store %arg8[%c0_8, %c0_9, %c0_10], %2 {strides = array<i32>} : memref<2x16x1xf32, #tpu.memory_space<vmem>>, vector<2x16x1xf32>,
      %c0_11 = arith.constant 0 : index
      %c0_12 = arith.constant 0 : index
      %c0_13 = arith.constant 0 : index
      %15 = vector.load %arg9[%c0_11, %c0_12, %c0_13] : memref<2x16x1xf32, #tpu.memory_space<vmem>>, vector<2x16x1xf32>
      tpu.vector_store %arg9[%c0_11, %c0_12, %c0_13], %4 {strides = array<i32>} : memref<2x16x1xf32, #tpu.memory_space<vmem>>, vector<2x16x1xf32>,
    } else {
    }
    %c0_i32_4 = arith.constant 0 : i32
    %8 = arith.cmpi sgt, %arg1, %c0_i32_4 : i32
    %9 = arith.extui %8 : i1 to i32
    %c0_i32_5 = arith.constant 0 : i32
    %10 = arith.cmpi ne, %9, %c0_i32_5 : i32
    scf.if %10 {
      %c0_8 = arith.constant 0 : index
      %c0_9 = arith.constant 0 : index
      %c0_10 = arith.constant 0 : index
      %14 = vector.load %arg8[%c0_8, %c0_9, %c0_10] : memref<2x16x1xf32, #tpu.memory_space<vmem>>, vector<2x16x1xf32>
      %15 = arith.maximumf %14, %2 : vector<2x16x1xf32>
      %c0_11 = arith.constant 0 : index
      %c0_12 = arith.constant 0 : index
      %c0_13 = arith.constant 0 : index
      %16 = vector.load %arg8[%c0_11, %c0_12, %c0_13] : memref<2x16x1xf32, #tpu.memory_space<vmem>>, vector<2x16x1xf32>
      tpu.vector_store %arg8[%c0_11, %c0_12, %c0_13], %15 {strides = array<i32>} : memref<2x16x1xf32, #tpu.memory_space<vmem>>, vector<2x16x1xf32>,
      %c0_14 = arith.constant 0 : index
      %c0_15 = arith.constant 0 : index
      %c0_16 = arith.constant 0 : index
      %17 = vector.load %arg9[%c0_14, %c0_15, %c0_16] : memref<2x16x1xf32, #tpu.memory_space<vmem>>, vector<2x16x1xf32>
      %18 = arith.addf %17, %4 : vector<2x16x1xf32>
      %c0_17 = arith.constant 0 : index
      %c0_18 = arith.constant 0 : index
      %c0_19 = arith.constant 0 : index
      %19 = vector.load %arg9[%c0_17, %c0_18, %c0_19] : memref<2x16x1xf32, #tpu.memory_space<vmem>>, vector<2x16x1xf32>
      tpu.vector_store %arg9[%c0_17, %c0_18, %c0_19], %18 {strides = array<i32>} : memref<2x16x1xf32, #tpu.memory_space<vmem>>, vector<2x16x1xf32>,
    } else {
    }
    %c0_i32_6 = arith.constant 0 : i32
    %11 = arith.cmpi eq, %arg1, %c0_i32_6 : i32
    %12 = arith.extui %11 : i1 to i32
    %c0_i32_7 = arith.constant 0 : i32
    %13 = arith.cmpi ne, %12, %c0_i32_7 : i32
    scf.if %13 {
      %c0_8 = arith.constant 0 : index
      %c0_9 = arith.constant 0 : index
      %c0_10 = arith.constant 0 : index
      %14 = vector.load %arg8[%c0_8, %c0_9, %c0_10] : memref<2x16x1xf32, #tpu.memory_space<vmem>>, vector<2x16x1xf32>
      %c0_11 = arith.constant 0 : index
      %c0_12 = arith.constant 0 : index
      %c0_13 = arith.constant 0 : index
      %15 = vector.load %arg9[%c0_11, %c0_12, %c0_13] : memref<2x16x1xf32, #tpu.memory_space<vmem>>, vector<2x16x1xf32>
      %cst_14 = arith.constant 9.765625E-4 : f32
      %16 = vector.broadcast %cst_14 : f32 to vector<2x16x1xf32>
      %17 = arith.mulf %15, %16 : vector<2x16x1xf32>
      %c0_15 = arith.constant 0 : index
      %c0_16 = arith.constant 0 : index
      %18 = vector.load %arg3[%c0_15, %c0_16] : memref<16x2xf32, #tpu.memory_space<vmem>>, vector<16x2xf32>
      %c0_17 = arith.constant 0 : index
      %c0_18 = arith.constant 0 : index
      %19 = vector.load %arg4[%c0_17, %c0_18] : memref<1x2xf32, #tpu.memory_space<vmem>>, vector<1x2xf32>
      %c0_19 = arith.constant 0 : index
      %c0_20 = arith.constant 0 : index
      %20 = vector.load %arg5[%c0_19, %c0_20] : memref<2x16xf32, #tpu.memory_space<vmem>>, vector<2x16xf32>
      %c0_21 = arith.constant 0 : index
      %c0_22 = arith.constant 0 : index
      %21 = vector.load %arg6[%c0_21, %c0_22] : memref<1x16xf32, #tpu.memory_space<vmem>>, vector<1x16xf32>
      %22 = vector.shape_cast %18 : vector<16x2xf32> to vector<1x16x2xf32>
      %23 = vector.broadcast %14 : vector<2x16x1xf32> to vector<2x16x2xf32>
      %24 = vector.broadcast %22 : vector<1x16x2xf32> to vector<2x16x2xf32>
      %25 = arith.mulf %23, %24 : vector<2x16x2xf32>
      %cst_23 = arith.constant dense<0.000000e+00> : vector<2x2xf32>
      %26 = vector.multi_reduction <add>, %25, %cst_23 [1] : vector<2x16x2xf32> to vector<2x2xf32>
      %27 = vector.broadcast %19 : vector<1x2xf32> to vector<2x2xf32>
      %28 = arith.addf %26, %27 : vector<2x2xf32>
      %cst_24 = arith.constant 0.000000e+00 : f32
      %29 = vector.broadcast %cst_24 : f32 to vector<2x2xf32>
      %30 = arith.maximumf %28, %29 : vector<2x2xf32>
      %31 = vector.shape_cast %30 : vector<2x2xf32> to vector<2x2x1xf32>
      %32 = vector.shape_cast %20 : vector<2x16xf32> to vector<1x2x16xf32>
      %33 = vector.broadcast %31 : vector<2x2x1xf32> to vector<2x2x16xf32>
      %34 = vector.broadcast %32 : vector<1x2x16xf32> to vector<2x2x16xf32>
      %35 = arith.mulf %33, %34 : vector<2x2x16xf32>
      %cst_25 = arith.constant dense<0.000000e+00> : vector<2x16xf32>
      %36 = vector.multi_reduction <add>, %35, %cst_25 [1] : vector<2x2x16xf32> to vector<2x16xf32>
      %37 = vector.broadcast %21 : vector<1x16xf32> to vector<2x16xf32>
      %38 = arith.addf %36, %37 : vector<2x16xf32>
      %39 = vector.shape_cast %18 : vector<16x2xf32> to vector<1x16x2xf32>
      %40 = vector.broadcast %17 : vector<2x16x1xf32> to vector<2x16x2xf32>
      %41 = vector.broadcast %39 : vector<1x16x2xf32> to vector<2x16x2xf32>
      %42 = arith.mulf %40, %41 : vector<2x16x2xf32>
      %cst_26 = arith.constant dense<0.000000e+00> : vector<2x2xf32>
      %43 = vector.multi_reduction <add>, %42, %cst_26 [1] : vector<2x16x2xf32> to vector<2x2xf32>
      %44 = vector.broadcast %19 : vector<1x2xf32> to vector<2x2xf32>
      %45 = arith.addf %43, %44 : vector<2x2xf32>
      %cst_27 = arith.constant 0.000000e+00 : f32
      %46 = vector.broadcast %cst_27 : f32 to vector<2x2xf32>
      %47 = arith.maximumf %45, %46 : vector<2x2xf32>
      %48 = vector.shape_cast %47 : vector<2x2xf32> to vector<2x2x1xf32>
      %49 = vector.shape_cast %20 : vector<2x16xf32> to vector<1x2x16xf32>
      %50 = vector.broadcast %48 : vector<2x2x1xf32> to vector<2x2x16xf32>
      %51 = vector.broadcast %49 : vector<1x2x16xf32> to vector<2x2x16xf32>
      %52 = arith.mulf %50, %51 : vector<2x2x16xf32>
      %cst_28 = arith.constant dense<0.000000e+00> : vector<2x16xf32>
      %53 = vector.multi_reduction <add>, %52, %cst_28 [1] : vector<2x2x16xf32> to vector<2x16xf32>
      %54 = vector.broadcast %21 : vector<1x16xf32> to vector<2x16xf32>
      %55 = arith.addf %53, %54 : vector<2x16xf32>
      %56 = arith.addf %38, %55 : vector<2x16xf32>
      %cst_29 = arith.constant 0.000000e+00 : f32
      %57 = vector.broadcast %cst_29 : f32 to vector<2x16xf32>
      %58 = arith.subf %57, %56 : vector<2x16xf32>
      %59 = math.exp %58 : vector<2x16xf32>
      %cst_30 = arith.constant 1.000000e+00 : f32
      %60 = vector.broadcast %cst_30 : f32 to vector<2x16xf32>
      %61 = arith.addf %60, %59 : vector<2x16xf32>
      %cst_31 = arith.constant 1.000000e+00 : f32
      %62 = vector.broadcast %cst_31 : f32 to vector<2x16xf32>
      %63 = arith.divf %62, %61 : vector<2x16xf32>
      %64 = vector.shape_cast %63 : vector<2x16xf32> to vector<2x1x16xf32>
      %c0_32 = arith.constant 0 : index
      %c0_33 = arith.constant 0 : index
      %c0_34 = arith.constant 0 : index
      %65 = vector.load %arg7[%c0_32, %c0_33, %c0_34] : memref<2x1x16xf32, #tpu.memory_space<vmem>>, vector<2x1x16xf32>
      tpu.vector_store %arg7[%c0_32, %c0_33, %c0_34], %64 {strides = array<i32>} : memref<2x1x16xf32, #tpu.memory_space<vmem>>, vector<2x1x16xf32>,
    } else {
    }
    return
  }
  func.func @transform_0(%arg0: i32, %arg1: i32) -> (i32, i32, i32) {
    %c0_i32 = arith.constant 0 : i32
    %c0_i32_0 = arith.constant 0 : i32
    return %arg0, %c0_i32, %arg1 : i32, i32, i32
  }
  func.func @transform_1(%arg0: i32, %arg1: i32) -> (i32, i32) {
    %c0_i32 = arith.constant 0 : i32
    %c0_i32_0 = arith.constant 0 : i32
    %c0_i32_1 = arith.constant 0 : i32
    return %c0_i32, %c0_i32_0 : i32, i32
  }
  func.func @transform_2(%arg0: i32, %arg1: i32) -> (i32, i32) {
    %c0_i32 = arith.constant 0 : i32
    %c0_i32_0 = arith.constant 0 : i32
    %c0_i32_1 = arith.constant 0 : i32
    return %c0_i32, %c0_i32_0 : i32, i32
  }
  func.func @transform_3(%arg0: i32, %arg1: i32) -> (i32, i32) {
    %c0_i32 = arith.constant 0 : i32
    %c0_i32_0 = arith.constant 0 : i32
    %c0_i32_1 = arith.constant 0 : i32
    return %c0_i32, %c0_i32_0 : i32, i32
  }
  func.func @transform_4(%arg0: i32, %arg1: i32) -> (i32, i32) {
    %c0_i32 = arith.constant 0 : i32
    %c0_i32_0 = arith.constant 0 : i32
    %c0_i32_1 = arith.constant 0 : i32
    return %c0_i32, %c0_i32_0 : i32, i32
  }
  func.func @transform_5(%arg0: i32, %arg1: i32) -> (i32, i32, i32) {
    %c0_i32 = arith.constant 0 : i32
    %c0_i32_0 = arith.constant 0 : i32
    %c0_i32_1 = arith.constant 0 : i32
    return %arg0, %c0_i32, %c0_i32_0 : i32, i32, i32
  }
}

module attributes {stable_mosaic.version = 11 : i64} {
  func.func @_apply_kernel(%arg0: i32, %arg1: i32, %arg2: memref<2x16x1xf32, #tpu.memory_space<vmem>>, %arg3: memref<2x16x1024xf32, #tpu.memory_space<vmem>>, %arg4: memref<2x16x1024xf32, #tpu.memory_space<vmem>>) attributes {dimension_semantics = [#tpu.dimension_semantics<parallel>, #tpu.dimension_semantics<parallel>], iteration_bounds = array<i64: 1, 1>, scalar_prefetch = 0 : i64, scratch_operands = 0 : i64, tpu.core_type = #tpu.core_type<tc>, window_params = [{transform_indices = @transform_0, window_bounds = array<i64: 2, 16, 1>}, {transform_indices = @transform_1, window_bounds = array<i64: 2, 16, 1024>}, {transform_indices = @transform_2, window_bounds = array<i64: 2, 16, 1024>}]} {
    %c0 = arith.constant 0 : index
    %c0_0 = arith.constant 0 : index
    %c0_1 = arith.constant 0 : index
    %0 = vector.load %arg3[%c0, %c0_0, %c0_1] : memref<2x16x1024xf32, #tpu.memory_space<vmem>>, vector<2x16x1024xf32>
    %c0_2 = arith.constant 0 : index
    %c0_3 = arith.constant 0 : index
    %c0_4 = arith.constant 0 : index
    %1 = vector.load %arg2[%c0_2, %c0_3, %c0_4] : memref<2x16x1xf32, #tpu.memory_space<vmem>>, vector<2x16x1xf32>
    %2 = vector.broadcast %1 : vector<2x16x1xf32> to vector<2x16x1024xf32>
    %3 = arith.mulf %0, %2 : vector<2x16x1024xf32>
    %c0_5 = arith.constant 0 : index
    %c0_6 = arith.constant 0 : index
    %c0_7 = arith.constant 0 : index
    %4 = vector.load %arg4[%c0_5, %c0_6, %c0_7] : memref<2x16x1024xf32, #tpu.memory_space<vmem>>, vector<2x16x1024xf32>
    tpu.vector_store %arg4[%c0_5, %c0_6, %c0_7], %3 {strides = array<i32>} : memref<2x16x1024xf32, #tpu.memory_space<vmem>>, vector<2x16x1024xf32>,
    return
  }
  func.func @transform_0(%arg0: i32, %arg1: i32) -> (i32, i32, i32) {
    %c0_i32 = arith.constant 0 : i32
    %c0_i32_0 = arith.constant 0 : i32
    %c0_i32_1 = arith.constant 0 : i32
    return %arg0, %c0_i32, %c0_i32_0 : i32, i32, i32
  }
  func.func @transform_1(%arg0: i32, %arg1: i32) -> (i32, i32, i32) {
    %c0_i32 = arith.constant 0 : i32
    %c0_i32_0 = arith.constant 0 : i32
    return %arg0, %c0_i32, %arg1 : i32, i32, i32
  }
  func.func @transform_2(%arg0: i32, %arg1: i32) -> (i32, i32, i32) {
    %c0_i32 = arith.constant 0 : i32
    %c0_i32_0 = arith.constant 0 : i32
    return %arg0, %c0_i32, %arg1 : i32, i32, i32
  }
}

</mosaic_0001>

<llo_original>
// kernel: cam_forward.3
$region0: #{cam_forward.3}
  #allocation0 [shape = 'u32[]', space=smem, size = 0x4, offset = 0x4, fixed_abs, tag = 'smem constant byte address 0x4 - core index']
  #allocation1 [shape = 'u32[144,128]{1,0:T(1,128)}', space=vmem, size = 0x12000, scoped, tag = 'internal scratch']
  %s0 = inlined_call_operand.vmem [shape: f32[2,16,1], index: 0, kind: input, shape index: {}]
  %s1 = inlined_call_operand.vmem [shape: f32[2,16,1024], index: 1, kind: input, shape index: {}]
  %s2 = inlined_call_operand.vmem [shape: f32[2,16,1024], index: 2, kind: output, shape index: {}]
  %s3 = sld [smem:[#allocation0]]
  $region18: #{cam_forward.3} parent=0
    _
  %s5 = ssub.s32 1, %s3
  %s6 = scalar_select 0, %s5, %s3
  // Predicated region
  $region2: #{cam_forward.3} parent=0 // pred_check
    _
  $region3: #{cam_forward.3} parent=0 // pred_check_branch
    %8 = sbr.rel (0) target = $region5
  $region4: #{cam_forward.3} parent=0 // pred_region
    _
  $region5: #{cam_forward.3} parent=0 // pred_fallthru
    _
  // Predicated region
  $region6: #{cam_forward.3} parent=0 // pred_check
    _
  $region7: #{cam_forward.3} parent=0 // pred_check_branch
    %10 = sbr.rel (0) target = $region9
  $region8: #{cam_forward.3} parent=0 // pred_region
    _
  $region9: #{cam_forward.3} parent=0 // pred_fallthru
    _
  %v11 = vld [vmem:[%s1] sm:$0xff]
  %v12 = vld [vmem:[%s1 + $0x8] sm:$0xff]
  %v13 = vld [vmem:[%s1 + $0x10] sm:$0xff]
  %v14 = vld [vmem:[%s1 + $0x18] sm:$0xff]
  %v15 = vld [vmem:[%s1 + $0x20] sm:$0xff]
  %v16 = vld [vmem:[%s1 + $0x28] sm:$0xff]
  %v17 = vld [vmem:[%s1 + $0x30] sm:$0xff]
  %v18 = vld [vmem:[%s1 + $0x38] sm:$0xff]
  %v19 = vld [vmem:[%s1 + $0x40] sm:$0xff]
  %v20 = vld [vmem:[%s1 + $0x48] sm:$0xff]
  %v21 = vld [vmem:[%s1 + $0x50] sm:$0xff]
  %v22 = vld [vmem:[%s1 + $0x58] sm:$0xff]
  %v23 = vld [vmem:[%s1 + $0x60] sm:$0xff]
  %v24 = vld [vmem:[%s1 + $0x68] sm:$0xff]
  %v25 = vld [vmem:[%s1 + $0x70] sm:$0xff]
  %v26 = vld [vmem:[%s1 + $0x78] sm:$0xff]
  %v27 = vld [vmem:[%s1 + $0x80] sm:$0xff]
  %v28 = vld [vmem:[%s1 + $0x88] sm:$0xff]
  %v29 = vld [vmem:[%s1 + $0x90] sm:$0xff]
  %v30 = vld [vmem:[%s1 + $0x98] sm:$0xff]
  %v31 = vld [vmem:[%s1 + $0xa0] sm:$0xff]
  %v32 = vld [vmem:[%s1 + $0xa8] sm:$0xff]
  %v33 = vld [vmem:[%s1 + $0xb0] sm:$0xff]
  %v34 = vld [vmem:[%s1 + $0xb8] sm:$0xff]
  %v35 = vld [vmem:[%s1 + $0xc0] sm:$0xff]
  %v36 = vld [vmem:[%s1 + $0xc8] sm:$0xff]
  %v37 = vld [vmem:[%s1 + $0xd0] sm:$0xff]
  %v38 = vld [vmem:[%s1 + $0xd8] sm:$0xff]
  %v39 = vld [vmem:[%s1 + $0xe0] sm:$0xff]
  %v40 = vld [vmem:[%s1 + $0xe8] sm:$0xff]
  %v41 = vld [vmem:[%s1 + $0xf0] sm:$0xff]
  %v42 = vld [vmem:[%s1 + $0xf8] sm:$0xff]
  %v43 = vld [vmem:[%s0] sm:$0xff]
  %v44 = vld [vmem:[%s0 + $0x8] sm:$0xff]
  %v45 = vld [vmem:[%s0 + $0x10] sm:$0xff]
  %v46 = vld [vmem:[%s0 + $0x18] sm:$0xff]
  %48 = vset.pattern.permute.xlu0 0
  %49 = vperm.xlu0 %48, %v43
  %v50 = vpop.permute.xlu0 %49
  %53 = vset.pattern.permute.xlu0 0
  %54 = vperm.xlu0 %53, %v44
  %v55 = vpop.permute.xlu0 %54
  %58 = vset.pattern.permute.xlu0 0
  %59 = vperm.xlu0 %58, %v45
  %v60 = vpop.permute.xlu0 %59
  %63 = vset.pattern.permute.xlu0 0
  %64 = vperm.xlu0 %63, %v46
  %v65 = vpop.permute.xlu0 %64
  %v67 = vmul.f32 %v11, %v50
  %v68 = vmul.f32 %v12, %v50
  %v69 = vmul.f32 %v13, %v50
  %v70 = vmul.f32 %v14, %v50
  %v71 = vmul.f32 %v15, %v50
  %v72 = vmul.f32 %v16, %v50
  %v73 = vmul.f32 %v17, %v50
  %v74 = vmul.f32 %v18, %v50
  %v75 = vmul.f32 %v19, %v55
  %v76 = vmul.f32 %v20, %v55
  %v77 = vmul.f32 %v21, %v55
  %v78 = vmul.f32 %v22, %v55
  %v79 = vmul.f32 %v23, %v55
  %v80 = vmul.f32 %v24, %v55
  %v81 = vmul.f32 %v25, %v55
  %v82 = vmul.f32 %v26, %v55
  %v83 = vmul.f32 %v27, %v60
  %v84 = vmul.f32 %v28, %v60
  %v85 = vmul.f32 %v29, %v60
  %v86 = vmul.f32 %v30, %v60
  %v87 = vmul.f32 %v31, %v60
  %v88 = vmul.f32 %v32, %v60
  %v89 = vmul.f32 %v33, %v60
  %v90 = vmul.f32 %v34, %v60
  %v91 = vmul.f32 %v35, %v65
  %v92 = vmul.f32 %v36, %v65
  %v93 = vmul.f32 %v37, %v65
  %v94 = vmul.f32 %v38, %v65
  %v95 = vmul.f32 %v39, %v65
  %v96 = vmul.f32 %v40, %v65
  %v97 = vmul.f32 %v41, %v65
  %v98 = vmul.f32 %v42, %v65
  %99 = vst [vmem:[%s2] sm:$0xff] %v67
  %100 = vst [vmem:[%s2 + $0x8] sm:$0xff] %v68
  %101 = vst [vmem:[%s2 + $0x10] sm:$0xff] %v69
  %102 = vst [vmem:[%s2 + $0x18] sm:$0xff] %v70
  %103 = vst [vmem:[%s2 + $0x20] sm:$0xff] %v71
  %104 = vst [vmem:[%s2 + $0x28] sm:$0xff] %v72
  %105 = vst [vmem:[%s2 + $0x30] sm:$0xff] %v73
  %106 = vst [vmem:[%s2 + $0x38] sm:$0xff] %v74
  %107 = vst [vmem:[%s2 + $0x40] sm:$0xff] %v75
  %108 = vst [vmem:[%s2 + $0x48] sm:$0xff] %v76
  %109 = vst [vmem:[%s2 + $0x50] sm:$0xff] %v77
  %110 = vst [vmem:[%s2 + $0x58] sm:$0xff] %v78
  %111 = vst [vmem:[%s2 + $0x60] sm:$0xff] %v79
  %112 = vst [vmem:[%s2 + $0x68] sm:$0xff] %v80
  %113 = vst [vmem:[%s2 + $0x70] sm:$0xff] %v81
  %114 = vst [vmem:[%s2 + $0x78] sm:$0xff] %v82
  %115 = vst [vmem:[%s2 + $0x80] sm:$0xff] %v83
  %116 = vst [vmem:[%s2 + $0x88] sm:$0xff] %v84
  %117 = vst [vmem:[%s2 + $0x90] sm:$0xff] %v85
  %118 = vst [vmem:[%s2 + $0x98] sm:$0xff] %v86
  %119 = vst [vmem:[%s2 + $0xa0] sm:$0xff] %v87
  %120 = vst [vmem:[%s2 + $0xa8] sm:$0xff] %v88
  %121 = vst [vmem:[%s2 + $0xb0] sm:$0xff] %v89
  %122 = vst [vmem:[%s2 + $0xb8] sm:$0xff] %v90
  %123 = vst [vmem:[%s2 + $0xc0] sm:$0xff] %v91
  %124 = vst [vmem:[%s2 + $0xc8] sm:$0xff] %v92
  %125 = vst [vmem:[%s2 + $0xd0] sm:$0xff] %v93
  %126 = vst [vmem:[%s2 + $0xd8] sm:$0xff] %v94
  %127 = vst [vmem:[%s2 + $0xe0] sm:$0xff] %v95
  %128 = vst [vmem:[%s2 + $0xe8] sm:$0xff] %v96
  %129 = vst [vmem:[%s2 + $0xf0] sm:$0xff] %v97
  %130 = vst [vmem:[%s2 + $0xf8] sm:$0xff] %v98
  // Predicated region
  $region10: #{cam_forward.3} parent=0 // pred_check
    _
  $region11: #{cam_forward.3} parent=0 // pred_check_branch
    %132 = sbr.rel (0) target = $region13
  $region12: #{cam_forward.3} parent=0 // pred_region
    _
  $region13: #{cam_forward.3} parent=0 // pred_fallthru
    _
  // Predicated region
  $region14: #{cam_forward.3} parent=0 // pred_check
    _
  $region15: #{cam_forward.3} parent=0 // pred_check_branch
    %134 = sbr.rel (0) target = $region17
  $region16: #{cam_forward.3} parent=0 // pred_region
    _
  $region17: #{cam_forward.3} parent=0 // pred_fallthru
    _

// kernel: cam_forward.2
$region0: #{cam_forward.2}
  #allocation0 [shape = 'u32[]', space=smem, size = 0x4, offset = 0x4, fixed_abs, tag = 'smem constant byte address 0x4 - core index']
  #allocation1 [shape = 'u32[144,128]{1,0:T(1,128)}', space=vmem, size = 0x12000, scoped, tag = 'internal scratch']
  #allocation2 [shape = 'f32[2,16,1]{2,1,0:T(8,128)}', space=vmem, size = 0x4000, scoped, tag = 'scratch operand']
  #allocation3 [shape = 'f32[2,16,1]{2,1,0:T(8,128)}', space=vmem, size = 0x4000, scoped, tag = 'scratch operand']
  %s0 = inlined_call_operand.vmem [shape: f32[2,16,1024], index: 0, kind: input, shape index: {}]
  %s1 = inlined_call_operand.vmem [shape: f32[16,2], index: 1, kind: input, shape index: {}]
  %s2 = inlined_call_operand.vmem [shape: f32[1,2], index: 2, kind: input, shape index: {}]
  %s3 = inlined_call_operand.vmem [shape: f32[2,16], index: 3, kind: input, shape index: {}]
  %s4 = inlined_call_operand.vmem [shape: f32[1,16], index: 4, kind: input, shape index: {}]
  %s5 = inlined_call_operand.vmem [shape: f32[2,1,16], index: 5, kind: output, shape index: {}]
  %s6 = sld [smem:[#allocation0]]
  $region42: #{cam_forward.2} parent=0
    _
  %s8 = ssub.s32 1, %s6
  %s9 = scalar_select 0, %s8, %s6
  // Predicated region
  $region2: #{cam_forward.2} parent=0 // pred_check
    _
  $region3: #{cam_forward.2} parent=0 // pred_check_branch
    %11 = sbr.rel (0) target = $region5
  $region4: #{cam_forward.2} parent=0 // pred_region
    _
  $region5: #{cam_forward.2} parent=0 // pred_fallthru
    _
  // Predicated region
  $region6: #{cam_forward.2} parent=0 // pred_check
    _
  $region7: #{cam_forward.2} parent=0 // pred_check_branch
    %13 = sbr.rel (0) target = $region9
  $region8: #{cam_forward.2} parent=0 // pred_region
    _
  $region9: #{cam_forward.2} parent=0 // pred_fallthru
    _
  // Predicated region
  $region10: #{cam_forward.2} parent=0 // pred_check
    _
  $region11: #{cam_forward.2} parent=0 // pred_check_branch
    %15 = sbr.rel (0) target = $region13
  $region12: #{cam_forward.2} parent=0 // pred_region
    _
  $region13: #{cam_forward.2} parent=0 // pred_fallthru
    _
  // Predicated region
  $region14: #{cam_forward.2} parent=0 // pred_check
    _
  $region15: #{cam_forward.2} parent=0 // pred_check_branch
    %17 = sbr.rel (0) target = $region17
  $region16: #{cam_forward.2} parent=0 // pred_region
    _
  $region17: #{cam_forward.2} parent=0 // pred_fallthru
    _
  // Predicated region
  $region18: #{cam_forward.2} parent=0 // pred_check
    _
  $region19: #{cam_forward.2} parent=0 // pred_check_branch
    %19 = sbr.rel (0) target = $region21
  $region20: #{cam_forward.2} parent=0 // pred_region
    _
  $region21: #{cam_forward.2} parent=0 // pred_fallthru
    _
  %v20 = vld [vmem:[%s0] sm:$0xff]
  %v21 = vld [vmem:[%s0 + $0x8] sm:$0xff]
  %v22 = vld [vmem:[%s0 + $0x10] sm:$0xff]
  %v23 = vld [vmem:[%s0 + $0x18] sm:$0xff]
  %v24 = vld [vmem:[%s0 + $0x20] sm:$0xff]
  %v25 = vld [vmem:[%s0 + $0x28] sm:$0xff]
  %v26 = vld [vmem:[%s0 + $0x30] sm:$0xff]
  %v27 = vld [vmem:[%s0 + $0x38] sm:$0xff]
  %v28 = vld [vmem:[%s0 + $0x40] sm:$0xff]
  %v29 = vld [vmem:[%s0 + $0x48] sm:$0xff]
  %v30 = vld [vmem:[%s0 + $0x50] sm:$0xff]
  %v31 = vld [vmem:[%s0 + $0x58] sm:$0xff]
  %v32 = vld [vmem:[%s0 + $0x60] sm:$0xff]
  %v33 = vld [vmem:[%s0 + $0x68] sm:$0xff]
  %v34 = vld [vmem:[%s0 + $0x70] sm:$0xff]
  %v35 = vld [vmem:[%s0 + $0x78] sm:$0xff]
  %v36 = vld [vmem:[%s0 + $0x80] sm:$0xff]
  %v37 = vld [vmem:[%s0 + $0x88] sm:$0xff]
  %v38 = vld [vmem:[%s0 + $0x90] sm:$0xff]
  %v39 = vld [vmem:[%s0 + $0x98] sm:$0xff]
  %v40 = vld [vmem:[%s0 + $0xa0] sm:$0xff]
  %v41 = vld [vmem:[%s0 + $0xa8] sm:$0xff]
  %v42 = vld [vmem:[%s0 + $0xb0] sm:$0xff]
  %v43 = vld [vmem:[%s0 + $0xb8] sm:$0xff]
  %v44 = vld [vmem:[%s0 + $0xc0] sm:$0xff]
  %v45 = vld [vmem:[%s0 + $0xc8] sm:$0xff]
  %v46 = vld [vmem:[%s0 + $0xd0] sm:$0xff]
  %v47 = vld [vmem:[%s0 + $0xd8] sm:$0xff]
  %v48 = vld [vmem:[%s0 + $0xe0] sm:$0xff]
  %v49 = vld [vmem:[%s0 + $0xe8] sm:$0xff]
  %v50 = vld [vmem:[%s0 + $0xf0] sm:$0xff]
  %v51 = vld [vmem:[%s0 + $0xf8] sm:$0xff]
  %v52 = vmax.f32 %v20, %v21
  %v53 = vmax.f32 %v52, %v22
  %v54 = vmax.f32 %v53, %v23
  %v55 = vmax.f32 %v54, %v24
  %v56 = vmax.f32 %v55, %v25
  %v57 = vmax.f32 %v56, %v26
  %v58 = vmax.f32 %v57, %v27
  %59 = vmax.xlane.f32.xlu0 %v58
  %v60 = vpop.xlane.xlu0 %59
  %v61 = vmax.f32 %v28, %v29
  %v62 = vmax.f32 %v61, %v30
  %v63 = vmax.f32 %v62, %v31
  %v64 = vmax.f32 %v63, %v32
  %v65 = vmax.f32 %v64, %v33
  %v66 = vmax.f32 %v65, %v34
  %v67 = vmax.f32 %v66, %v35
  %68 = vmax.xlane.f32.xlu0 %v67
  %v69 = vpop.xlane.xlu0 %68
  %v70 = vmax.f32 %v36, %v37
  %v71 = vmax.f32 %v70, %v38
  %v72 = vmax.f32 %v71, %v39
  %v73 = vmax.f32 %v72, %v40
  %v74 = vmax.f32 %v73, %v41
  %v75 = vmax.f32 %v74, %v42
  %v76 = vmax.f32 %v75, %v43
  %77 = vmax.xlane.f32.xlu0 %v76
  %v78 = vpop.xlane.xlu0 %77
  %v79 = vmax.f32 %v44, %v45
  %v80 = vmax.f32 %v79, %v46
  %v81 = vmax.f32 %v80, %v47
  %v82 = vmax.f32 %v81, %v48
  %v83 = vmax.f32 %v82, %v49
  %v84 = vmax.f32 %v83, %v50
  %v85 = vmax.f32 %v84, %v51
  %86 = vmax.xlane.f32.xlu0 %v85
  %v87 = vpop.xlane.xlu0 %86
  %v88 = vadd.f32 %v20, %v21
  %v89 = vadd.f32 %v88, %v22
  %v90 = vadd.f32 %v89, %v23
  %v91 = vadd.f32 %v90, %v24
  %v92 = vadd.f32 %v91, %v25
  %v93 = vadd.f32 %v92, %v26
  %v94 = vadd.f32 %v93, %v27
  %95 = vadd.xlane.f32.xlu0 %v94
  %v96 = vpop.xlane.xlu0 %95
  %v97 = vadd.f32 %v28, %v29
  %v98 = vadd.f32 %v97, %v30
  %v99 = vadd.f32 %v98, %v31
  %v100 = vadd.f32 %v99, %v32
  %v101 = vadd.f32 %v100, %v33
  %v102 = vadd.f32 %v101, %v34
  %v103 = vadd.f32 %v102, %v35
  %104 = vadd.xlane.f32.xlu0 %v103
  %v105 = vpop.xlane.xlu0 %104
  %v106 = vadd.f32 %v36, %v37
  %v107 = vadd.f32 %v106, %v38
  %v108 = vadd.f32 %v107, %v39
  %v109 = vadd.f32 %v108, %v40
  %v110 = vadd.f32 %v109, %v41
  %v111 = vadd.f32 %v110, %v42
  %v112 = vadd.f32 %v111, %v43
  %113 = vadd.xlane.f32.xlu0 %v112
  %v114 = vpop.xlane.xlu0 %113
  %v115 = vadd.f32 %v44, %v45
  %v116 = vadd.f32 %v115, %v46
  %v117 = vadd.f32 %v116, %v47
  %v118 = vadd.f32 %v117, %v48
  %v119 = vadd.f32 %v118, %v49
  %v120 = vadd.f32 %v119, %v50
  %v121 = vadd.f32 %v120, %v51
  %122 = vadd.xlane.f32.xlu0 %v121
  %v123 = vpop.xlane.xlu0 %122
  %p124 = scmp.eq.s32.totalorder 0, 0
  // Predicated region
  $region22: #{cam_forward.2} parent=0 // pred_check
    %p125 = pneg %p124
  $region23: #{cam_forward.2} parent=0 // pred_check_branch
    %127 = sbr.rel (%p125) target = $region25
  $region24: #{cam_forward.2} parent=0 // pred_region
    %vm128 = vcmask 7168
    %129 = vst.msk [vmem:[#allocation2] sm:$0xff] %vm128, %v60
    %130 = vst.msk [vmem:[#allocation2 + $0x8] sm:$0xff] %vm128, %v69
    %131 = vst.msk [vmem:[#allocation2 + $0x10] sm:$0xff] %vm128, %v78
    %132 = vst.msk [vmem:[#allocation2 + $0x18] sm:$0xff] %vm128, %v87
    %133 = vst.msk [vmem:[#allocation3] sm:$0xff] %vm128, %v96
    %134 = vst.msk [vmem:[#allocation3 + $0x8] sm:$0xff] %vm128, %v105
    %135 = vst.msk [vmem:[#allocation3 + $0x10] sm:$0xff] %vm128, %v114
    %136 = vst.msk [vmem:[#allocation3 + $0x18] sm:$0xff] %vm128, %v123
  $region25: #{cam_forward.2} parent=0 // pred_fallthru
    _
  %p137 = scmp.gt.s32.totalorder 0, 0
  // Predicated region
  $region26: #{cam_forward.2} parent=0 // pred_check
    %p138 = pneg %p137
  $region27: #{cam_forward.2} parent=0 // pred_check_branch
    %140 = sbr.rel (%p138) target = $region29
  $region28: #{cam_forward.2} parent=0 // pred_region
    %v141 = vld [vmem:[#allocation2] sm:$0xff]
    %v142 = vld [vmem:[#allocation2 + $0x8] sm:$0xff]
    %v143 = vld [vmem:[#allocation2 + $0x10] sm:$0xff]
    %v144 = vld [vmem:[#allocation2 + $0x18] sm:$0xff]
    %v145 = vmax.f32 %v141, %v60
    %v146 = vmax.f32 %v142, %v69
    %v147 = vmax.f32 %v143, %v78
    %v148 = vmax.f32 %v144, %v87
    %vm149 = vcmask 7168
    %150 = vst.msk [vmem:[#allocation2] sm:$0xff] %vm149, %v145
    %151 = vst.msk [vmem:[#allocation2 + $0x8] sm:$0xff] %vm149, %v146
    %152 = vst.msk [vmem:[#allocation2 + $0x10] sm:$0xff] %vm149, %v147
    %153 = vst.msk [vmem:[#allocation2 + $0x18] sm:$0xff] %vm149, %v148
    %v154 = vld [vmem:[#allocation3] sm:$0xff]
    %v155 = vld [vmem:[#allocation3 + $0x8] sm:$0xff]
    %v156 = vld [vmem:[#allocation3 + $0x10] sm:$0xff]
    %v157 = vld [vmem:[#allocation3 + $0x18] sm:$0xff]
    %v158 = vadd.f32 %v154, %v96
    %v159 = vadd.f32 %v155, %v105
    %v160 = vadd.f32 %v156, %v114
    %v161 = vadd.f32 %v157, %v123
    %162 = vst.msk [vmem:[#allocation3] sm:$0xff] %vm149, %v158
    %163 = vst.msk [vmem:[#allocation3 + $0x8] sm:$0xff] %vm149, %v159
    %164 = vst.msk [vmem:[#allocation3 + $0x10] sm:$0xff] %vm149, %v160
    %165 = vst.msk [vmem:[#allocation3 + $0x18] sm:$0xff] %vm149, %v161
  $region29: #{cam_forward.2} parent=0 // pred_fallthru
    _
  // Predicated region
  $region30: #{cam_forward.2} parent=0 // pred_check
    %p166 = pneg %p124
  $region31: #{cam_forward.2} parent=0 // pred_check_branch
    %168 = sbr.rel (%p166) target = $region33
  $region32: #{cam_forward.2} parent=0 // pred_region
    %v169 = vld [vmem:[#allocation2] sm:$0xff]
    %v170 = vld [vmem:[#allocation2 + $0x8] sm:$0xff]
    %v171 = vld [vmem:[#allocation2 + $0x10] sm:$0xff]
    %v172 = vld [vmem:[#allocation2 + $0x18] sm:$0xff]
    %v173 = vld [vmem:[#allocation3] sm:$0xff]
    %v174 = vld [vmem:[#allocation3 + $0x8] sm:$0xff]
    %v175 = vld [vmem:[#allocation3 + $0x10] sm:$0xff]
    %v176 = vld [vmem:[#allocation3 + $0x18] sm:$0xff]
    %v177 = vmul.f32 %v173, 0.0009765625
    %v178 = vmul.f32 %v174, 0.0009765625
    %v179 = vmul.f32 %v175, 0.0009765625
    %v180 = vmul.f32 %v176, 0.0009765625
    %v181 = vld [vmem:[%s1] sm:$0xff]
    %v182 = vld [vmem:[%s1 + $0x8] sm:$0xff]
    %v183 = vld [vmem:[%s2] sm:$0x1]
    %v184 = vld [vmem:[%s3] sm:$0x3]
    %v185 = vld [vmem:[%s4] sm:$0x1]
    %187 = vset.pattern.permute.xlu0 0
    %188 = vperm.xlu0 %187, %v169
    %v189 = vpop.permute.xlu0 %188
    %192 = vset.pattern.permute.xlu0 0
    %193 = vperm.xlu0 %192, %v170
    %v194 = vpop.permute.xlu0 %193
    %197 = vset.pattern.permute.xlu0 0
    %198 = vperm.xlu0 %197, %v171
    %v199 = vpop.permute.xlu0 %198
    %202 = vset.pattern.permute.xlu0 0
    %203 = vperm.xlu0 %202, %v172
    %v204 = vpop.permute.xlu0 %203
    %v206 = vmul.f32 %v189, %v181
    %v207 = vmul.f32 %v194, %v182
    %v208 = vmul.f32 %v199, %v181
    %v209 = vmul.f32 %v204, %v182
    %vm210 = vcmask 15360
    %v211 = vsel %vm210, %v206, 0.0
    %v212 = vsel %vm210, %v207, 0.0
    %v213 = vadd.f32 %v211, %v212
    %v214 = vrot.slane %v213, 4
    %v215 = vadd.f32 %v213, %v214
    %v216 = vrot.slane %v215, 2
    %v217 = vadd.f32 %v215, %v216
    %v218 = vrot.slane %v217, 1
    %v219 = vadd.f32 %v217, %v218
    %v220 = vsel %vm210, %v208, 0.0
    %v221 = vsel %vm210, %v209, 0.0
    %v222 = vadd.f32 %v220, %v221
    %v223 = vrot.slane %v222, 4
    %v224 = vadd.f32 %v222, %v223
    %v225 = vrot.slane %v224, 2
    %v226 = vadd.f32 %v224, %v225
    %v227 = vrot.slane %v226, 1
    %v228 = vadd.f32 %v226, %v227
    %v230 = vlaneseq
    %v231 = vshrl.u32 %v230, 7
    %v232 = vsub.s32 0, %v231
    %v233 = vrot.slane %v183, %v232
    %v235 = vadd.f32 %v219, %v233
    %v236 = vadd.f32 %v228, %v233
    %v237 = vmax.f32 %v235, 0.0
    %v238 = vmax.f32 %v236, 0.0
    %v239 = vlaneseq
    %v240 = vshrl.u32 %v239, 7
    %v241 = vsub.s32 0, %v240
    %v242 = vrot.slane %v237, %v241
    %244 = vbcast.lane.b32.xlu0 %v242, 256
    %v245 = vpop.permute.xlu0 %244
    %v246 = vlaneseq
    %v247 = vshrl.u32 %v246, 7
    %v248 = vsub.s32 0, %v247
    %v249 = vrot.slane %v238, %v248
    %251 = vbcast.lane.b32.xlu0 %v249, 256
    %v252 = vpop.permute.xlu0 %251
    %v253 = vmul.f32 %v245, %v184
    %v254 = vmul.f32 %v252, %v184
    %vm255 = vcmask 123904
    %v256 = vsel %vm255, %v253, 0.0
    %v257 = vrot.slane %v256, 4
    %v258 = vadd.f32 %v256, %v257
    %v259 = vrot.slane %v258, 2
    %v260 = vadd.f32 %v258, %v259
    %v261 = vrot.slane %v260, 1
    %v262 = vadd.f32 %v260, %v261
    %v263 = vsel %vm255, %v254, 0.0
    %v264 = vrot.slane %v263, 4
    %v265 = vadd.f32 %v263, %v264
    %v266 = vrot.slane %v265, 2
    %v267 = vadd.f32 %v265, %v266
    %v268 = vrot.slane %v267, 1
    %v269 = vadd.f32 %v267, %v268
    %v271 = vlaneseq
    %v272 = vshrl.u32 %v271, 7
    %v273 = vsub.s32 0, %v272
    %v274 = vrot.slane %v185, %v273
    %v276 = vadd.f32 %v262, %v274
    %v277 = vadd.f32 %v269, %v274
    %279 = vset.pattern.permute.xlu0 0
    %280 = vperm.xlu0 %279, %v177
    %v281 = vpop.permute.xlu0 %280
    %284 = vset.pattern.permute.xlu0 0
    %285 = vperm.xlu0 %284, %v178
    %v286 = vpop.permute.xlu0 %285
    %289 = vset.pattern.permute.xlu0 0
    %290 = vperm.xlu0 %289, %v179
    %v291 = vpop.permute.xlu0 %290
    %294 = vset.pattern.permute.xlu0 0
    %295 = vperm.xlu0 %294, %v180
    %v296 = vpop.permute.xlu0 %295
    %v298 = vmul.f32 %v281, %v181
    %v299 = vmul.f32 %v286, %v182
    %v300 = vmul.f32 %v291, %v181
    %v301 = vmul.f32 %v296, %v182
    %v302 = vsel %vm210, %v298, 0.0
    %v303 = vsel %vm210, %v299, 0.0
    %v304 = vadd.f32 %v302, %v303
    %v305 = vrot.slane %v304, 4
    %v306 = vadd.f32 %v304, %v305
    %v307 = vrot.slane %v306, 2
    %v308 = vadd.f32 %v306, %v307
    %v309 = vrot.slane %v308, 1
    %v310 = vadd.f32 %v308, %v309
    %v311 = vsel %vm210, %v300, 0.0
    %v312 = vsel %vm210, %v301, 0.0
    %v313 = vadd.f32 %v311, %v312
    %v314 = vrot.slane %v313, 4
    %v315 = vadd.f32 %v313, %v314
    %v316 = vrot.slane %v315, 2
    %v317 = vadd.f32 %v315, %v316
    %v318 = vrot.slane %v317, 1
    %v319 = vadd.f32 %v317, %v318
    %v320 = vadd.f32 %v310, %v233
    %v321 = vadd.f32 %v319, %v233
    %v322 = vmax.f32 %v320, 0.0
    %v323 = vmax.f32 %v321, 0.0
    %v324 = vlaneseq
    %v325 = vshrl.u32 %v324, 7
    %v326 = vsub.s32 0, %v325
    %v327 = vrot.slane %v322, %v326
    %329 = vbcast.lane.b32.xlu0 %v327, 256
    %v330 = vpop.permute.xlu0 %329
    %v331 = vlaneseq
    %v332 = vshrl.u32 %v331, 7
    %v333 = vsub.s32 0, %v332
    %v334 = vrot.slane %v323, %v333
    %336 = vbcast.lane.b32.xlu0 %v334, 256
    %v337 = vpop.permute.xlu0 %336
    %v338 = vmul.f32 %v330, %v184
    %v339 = vmul.f32 %v337, %v184
    %v340 = vsel %vm255, %v338, 0.0
    %v341 = vrot.slane %v340, 4
    %v342 = vadd.f32 %v340, %v341
    %v343 = vrot.slane %v342, 2
    %v344 = vadd.f32 %v342, %v343
    %v345 = vrot.slane %v344, 1
    %v346 = vadd.f32 %v344, %v345
    %v347 = vsel %vm255, %v339, 0.0
    %v348 = vrot.slane %v347, 4
    %v349 = vadd.f32 %v347, %v348
    %v350 = vrot.slane %v349, 2
    %v351 = vadd.f32 %v349, %v350
    %v352 = vrot.slane %v351, 1
    %v353 = vadd.f32 %v351, %v352
    %v354 = vadd.f32 %v346, %v274
    %v355 = vadd.f32 %v353, %v274
    %v356 = vadd.f32 %v276, %v354
    %v357 = vadd.f32 %v277, %v355
    %v358 = vsub.f32 0.0, %v356
    %v359 = vsub.f32 0.0, %v357
    %v360 = vmul.f32 %v358, 1.442695
    %v361 = vpow.pop %v360
    %v362 = vmul.f32 %v359, 1.442695
    %v363 = vpow.pop %v362
    %v364 = vadd.f32 %v361, 1.0
    %v365 = vadd.f32 %v363, 1.0
    %v366 = vrcp.pop %v364
    %v367 = vmul.f32 1.0, %v366
    %v368 = vrcp.pop %v365
    %v369 = vmul.f32 1.0, %v368
    %vm370 = vcmask 122880
    %371 = vst.msk [vmem:[%s5] sm:$0x1] %vm370, %v367
    %372 = vst.msk [vmem:[%s5 + $0x1] sm:$0x1] %vm370, %v369
  $region33: #{cam_forward.2} parent=0 // pred_fallthru
    _
  // Predicated region
  $region34: #{cam_forward.2} parent=0 // pred_check
    _
  $region35: #{cam_forward.2} parent=0 // pred_check_branch
    %374 = sbr.rel (0) target = $region37
  $region36: #{cam_forward.2} parent=0 // pred_region
    _
  $region37: #{cam_forward.2} parent=0 // pred_fallthru
    _
  // Predicated region
  $region38: #{cam_forward.2} parent=0 // pred_check
    _
  $region39: #{cam_forward.2} parent=0 // pred_check_branch
    %376 = sbr.rel (0) target = $region41
  $region40: #{cam_forward.2} parent=0 // pred_region
    _
  $region41: #{cam_forward.2} parent=0 // pred_fallthru
    _

</llo_original>
